<compile_context>
chip_gen: v7x
topology: tpu7x:2x2x1
jax: 0.10.0
libtpu: 0.0.40
codegen_flags: <defaults>
</compile_context>

<pallas_src>
import jax
import jax.numpy as jnp
from jax.experimental import pallas as pl
from jax.experimental.pallas import tpu as pltpu


def _choose_tiles(B, N, M, F, itemsize=4, vmem_budget=8 * 1024 * 1024):
    """Pick (batch_fold Bt, f tile tf).

    tf: largest power-of-two fraction of F (multiple of 128) whose (N, M, tf)
        v block fits the budget.  Bt: fold batches while the block stays under
        budget and at least 2 grid steps remain (keeps double-buffering /
        megacore useful).
    """
    tf = F
    if F % 128 == 0:
        while N * M * tf * itemsize > vmem_budget and tf % 256 == 0:
            tf //= 2
    # TODO(synk): pad F when it is not a multiple of 128 and too large for VMEM.
    bt = 1
    while (bt * 2 <= B and B % (bt * 2) == 0
           and (bt * 2) * N * M * tf * itemsize <= vmem_budget
           and (B // (bt * 2)) * (F // tf) >= 2):
        bt *= 2
    return bt, tf


def _mimo_attn_kernel(qu_ref, w_ref, b_ref, k_ref, v_ref, out_ref, attn_ref):
    # Block shapes: qu (Bt, M, Dq), w (Dq, Dk), b (1, Dk), k (Bt, N, Dk),
    # v (Bt, N, M, tf)  ->  out (Bt, M, tf), attn (Bt, M, N).
    fi = pl.program_id(1)
    bt_blk = v_ref.shape[0]
    n_keys = v_ref.shape[1]
    w = w_ref[...]                                      # (Dq, Dk)
    bias = b_ref[...]                                   # (1, Dk)

    for bt in range(bt_blk):                            # static unroll, Bt is small
        # Linear: query = qu @ W + b                    -> (M, Dk)
        query = jnp.dot(qu_ref[bt], w,
                        preferred_element_type=jnp.float32) + bias
        # scores s[m, n] = <k[n], query[m]>             -> (M, N)
        s = jax.lax.dot_general(query, k_ref[bt], (((1,), (1,)), ((), ())),
                                preferred_element_type=jnp.float32)
        # softmax over keys (last axis here == dim=1 of the (B, N, M) attn)
        s = s - jnp.max(s, axis=-1, keepdims=True)
        e = jnp.exp(s)
        p = e * pl.reciprocal(jnp.sum(e, axis=-1, keepdims=True), approx=True)

        @pl.when(fi == 0)                               # store attn once per batch blk
        def _(p=p, bt=bt):
            attn_ref[bt] = p.astype(attn_ref.dtype)

        # out[m, f] = sum_n p[m, n] * v[n, m, f]; stream v one key row at a time
        # instead of materializing the (N, M, tf) broadcast temporary.
        acc = p[:, 0:1] * v_ref[bt, 0]                  # (M, tf)
        for n in range(1, n_keys):
            acc = acc + p[:, n:n + 1] * v_ref[bt, n]
        out_ref[bt] = acc.astype(out_ref.dtype)


def mimo_attention(qu, k, v, w, b):
    """qu: (B, M, Dq)  k: (B, N, Dk)  v: (B, N, M, C, H, W)  w: (Dq, Dk)  b: (Dk,)
       returns (out_sum (B, M, C, H, W), attn (B, N, M))"""
    B, M, Dq = qu.shape
    _, N, Dk = k.shape
    _, _, _, C, H, W = v.shape
    F = C * H * W

    v_flat = v.reshape(B, N, M, F)
    b2 = b.reshape(1, Dk)

    bt, tf = _choose_tiles(B, N, M, F)
    grid = (B // bt, F // tf)

    # VMEM budget: double-buffered blocks + headroom (fits v7x's 64 MiB VMEM).
    blk_bytes = 4 * (bt * N * M * tf + bt * M * tf + bt * M * N
                     + bt * M * Dq + bt * N * Dk + Dq * Dk + Dk)
    vmem_limit = int(min(32 * 1024 * 1024,
                         max(16 * 1024 * 1024, 2 * blk_bytes + (4 << 20))))

    cost = pl.CostEstimate(
        flops=int(2 * B * (M * Dq * Dk + N * M * Dk + N * M * F)),
        transcendentals=int(B * N * M),
        bytes_accessed=int(4 * (B * N * M * F + B * M * F + B * M * N
                                + B * N * Dk + B * M * Dq + Dq * Dk + Dk)),
    )

    out_flat, attn_t = pl.pallas_call(
        _mimo_attn_kernel,
        out_shape=(
            jax.ShapeDtypeStruct((B, M, F), jnp.float32),
            jax.ShapeDtypeStruct((B, M, N), jnp.float32),
        ),
        grid_spec=pltpu.PrefetchScalarGridSpec(
            num_scalar_prefetch=0,
            grid=grid,
            in_specs=[
                pl.BlockSpec((bt, M, Dq), lambda bb, fi: (bb, 0, 0)),
                pl.BlockSpec((Dq, Dk), lambda bb, fi: (0, 0)),
                pl.BlockSpec((1, Dk), lambda bb, fi: (0, 0)),
                pl.BlockSpec((bt, N, Dk), lambda bb, fi: (bb, 0, 0)),
                pl.BlockSpec((bt, N, M, tf), lambda bb, fi: (bb, 0, 0, fi)),
            ],
            out_specs=[
                pl.BlockSpec((bt, M, tf), lambda bb, fi: (bb, 0, fi)),
                pl.BlockSpec((bt, M, N), lambda bb, fi: (bb, 0, 0)),
            ],
        ),
        compiler_params=pltpu.CompilerParams(
            dimension_semantics=("parallel", "arbitrary"),
            vmem_limit_bytes=vmem_limit),
        cost_estimate=cost,
    )(qu, w, b2, k, v_flat)

    out = out_flat.reshape(B, M, C, H, W)
    attn = jnp.transpose(attn_t, (0, 2, 1))            # (B, N, M), matches module
    return out, attn


def _reference(qu, k, v, w, b):
    query = jnp.einsum('bmd,dk->bmk', qu, w) + b        # (B, M, Dk)
    attn = jnp.einsum('bnk,bmk->bnm', k, query)         # (B, N, M)
    attn = jax.nn.softmax(attn, axis=1)
    out = jnp.einsum('bnm,bnmchw->bmchw', attn, v)
    return out, attn


if __name__ == "__main__":
    # Small shapes consistent with the module's forward.
    B, N, M = 2, 8, 8          # batch, key_num, query_num
    Dq, Dk = 32, 32            # query_size, key_size
    C, H, W = 4, 16, 16        # per-message feature map

    key = jax.random.PRNGKey(0)
    kq, kk, kv, kw, kb = jax.random.split(key, 5)

    qu = jax.random.normal(kq, (B, M, Dq), dtype=jnp.float32)
    k_in = jax.random.normal(kk, (B, N, Dk), dtype=jnp.float32)
    v_in = jax.random.normal(kv, (B, N, M, C, H, W), dtype=jnp.float32)

    # Deterministic Linear(query_size -> key_size) params (synthetic init).
    w = jax.random.normal(kw, (Dq, Dk), dtype=jnp.float32) * 0.1
    b = jax.random.normal(kb, (Dk,), dtype=jnp.float32) * 0.1

    out_sum, attn = mimo_attention(qu, k_in, v_in, w, b)
    jax.block_until_ready((out_sum, attn))

    ref_out, ref_attn = _reference(qu, k_in, v_in, w, b)
    assert out_sum.shape == (B, M, C, H, W)
    assert attn.shape == (B, N, M)
    # approx reciprocal in the softmax -> slightly looser tolerances than exact.
    assert jnp.allclose(attn, ref_attn, atol=5e-3, rtol=5e-3)
    assert jnp.allclose(out_sum, ref_out, atol=1e-2, rtol=1e-2)

    # TODO(synk): warp_flag=False path (v of shape (B, N, C, H, W) broadcast over
    # query_num) and the unused Sparsemax/dropout branches are not implemented.
    print("KERNEL_OK")
</pallas_src>

<mosaic_0001>
module attributes {stable_mosaic.version = 11 : i64} {
  func.func @_mimo_attn_kernel(%arg0: i32, %arg1: i32, %arg2: memref<1x8x32xf32, #tpu.memory_space<vmem>>, %arg3: memref<32x32xf32, #tpu.memory_space<vmem>>, %arg4: memref<1x32xf32, #tpu.memory_space<vmem>>, %arg5: memref<1x8x32xf32, #tpu.memory_space<vmem>>, %arg6: memref<1x8x8x1024xf32, #tpu.memory_space<vmem>>, %arg7: memref<1x8x1024xf32, #tpu.memory_space<vmem>>, %arg8: memref<1x8x8xf32, #tpu.memory_space<vmem>>) attributes {dimension_semantics = [#tpu.dimension_semantics<parallel>, #tpu.dimension_semantics<arbitrary>], iteration_bounds = array<i64: 2, 1>, scalar_prefetch = 0 : i64, scratch_operands = 0 : i64, tpu.core_type = #tpu.core_type<tc>, window_params = [{transform_indices = @transform_0, window_bounds = array<i64: 1, 8, 32>}, {pipeline_mode = #tpu.pipeline_mode<synchronous>, transform_indices = @transform_1, window_bounds = array<i64: 32, 32>}, {pipeline_mode = #tpu.pipeline_mode<synchronous>, transform_indices = @transform_2, window_bounds = array<i64: 1, 32>}, {transform_indices = @transform_3, window_bounds = array<i64: 1, 8, 32>}, {transform_indices = @transform_4, window_bounds = array<i64: 1, 8, 8, 1024>}, {transform_indices = @transform_5, window_bounds = array<i64: 1, 8, 1024>}, {transform_indices = @transform_6, window_bounds = array<i64: 1, 8, 8>}]} {
    %c0 = arith.constant 0 : index
    %c0_0 = arith.constant 0 : index
    %0 = vector.load %arg3[%c0, %c0_0] : memref<32x32xf32, #tpu.memory_space<vmem>>, vector<32x32xf32>
    %c0_1 = arith.constant 0 : index
    %c0_2 = arith.constant 0 : index
    %1 = vector.load %arg4[%c0_1, %c0_2] : memref<1x32xf32, #tpu.memory_space<vmem>>, vector<1x32xf32>
    %c0_3 = arith.constant 0 : index
    %c0_4 = arith.constant 0 : index
    %c0_5 = arith.constant 0 : index
    %2 = vector.load %arg2[%c0_3, %c0_4, %c0_5] : memref<1x8x32xf32, #tpu.memory_space<vmem>>, vector<1x8x32xf32>
    %3 = vector.shape_cast %2 : vector<1x8x32xf32> to vector<8x32xf32>
    %cst = arith.constant dense<0.000000e+00> : vector<8x32xf32>
    %4 = tpu.matmul %3, %0, %cst {dimension_numbers = #tpu.dot_dimension_numbers<[1], [0], [0], [1], [0, 0, 1, 1], [], []>} : vector<8x32xf32>, vector<32x32xf32>, vector<8x32xf32> -> vector<8x32xf32>
    %5 = vector.broadcast %1 : vector<1x32xf32> to vector<8x32xf32>
    %6 = arith.addf %4, %5 : vector<8x32xf32>
    %c0_6 = arith.constant 0 : index
    %c0_7 = arith.constant 0 : index
    %c0_8 = arith.constant 0 : index
    %7 = vector.load %arg5[%c0_6, %c0_7, %c0_8] : memref<1x8x32xf32, #tpu.memory_space<vmem>>, vector<1x8x32xf32>
    %8 = vector.shape_cast %7 : vector<1x8x32xf32> to vector<8x32xf32>
    %cst_9 = arith.constant dense<0.000000e+00> : vector<8x8xf32>
    %9 = tpu.matmul %6, %8, %cst_9 {dimension_numbers = #tpu.dot_dimension_numbers<[1], [1], [0], [0], [0, 0, 1, 0], [], []>} : vector<8x32xf32>, vector<8x32xf32>, vector<8x8xf32> -> vector<8x8xf32>
    %cst_10 = arith.constant dense<0xFF800000> : vector<8xf32>
    %10 = vector.multi_reduction <maximumf>, %9, %cst_10 [1] : vector<8x8xf32> to vector<8xf32>
    %11 = vector.shape_cast %10 : vector<8xf32> to vector<8x1xf32>
    %12 = vector.broadcast %11 : vector<8x1xf32> to vector<8x8xf32>
    %13 = arith.subf %9, %12 : vector<8x8xf32>
    %14 = math.exp %13 : vector<8x8xf32>
    %cst_11 = arith.constant dense<0.000000e+00> : vector<8xf32>
    %15 = vector.multi_reduction <add>, %14, %cst_11 [1] : vector<8x8xf32> to vector<8xf32>
    %16 = vector.shape_cast %15 : vector<8xf32> to vector<8x1xf32>
    %17 = tpu.reciprocal %16 {approx = true} : vector<8x1xf32> -> vector<8x1xf32>
    %18 = vector.broadcast %17 : vector<8x1xf32> to vector<8x8xf32>
    %19 = arith.mulf %14, %18 : vector<8x8xf32>
    %c0_i32 = arith.constant 0 : i32
    %20 = arith.cmpi eq, %arg1, %c0_i32 : i32
    %21 = arith.extui %20 : i1 to i32
    %c0_i32_12 = arith.constant 0 : i32
    %22 = arith.cmpi ne, %21, %c0_i32_12 : i32
    scf.if %22 {
      %c0_41 = arith.constant 0 : index
      %c0_42 = arith.constant 0 : index
      %c0_43 = arith.constant 0 : index
      %73 = vector.load %arg8[%c0_41, %c0_42, %c0_43] : memref<1x8x8xf32, #tpu.memory_space<vmem>>, vector<1x8x8xf32>
      %74 = vector.shape_cast %73 : vector<1x8x8xf32> to vector<8x8xf32>
      %75 = vector.shape_cast %19 : vector<8x8xf32> to vector<1x8x8xf32>
      tpu.vector_store %arg8[%c0_41, %c0_42, %c0_43], %75 {strides = array<i32>} : memref<1x8x8xf32, #tpu.memory_space<vmem>>, vector<1x8x8xf32>,
    } else {
    }
    %23 = vector.extract_strided_slice %19 {offsets = [0, 0], sizes = [8, 1], strides = [1, 1]} : vector<8x8xf32> to vector<8x1xf32>
    %c0_13 = arith.constant 0 : index
    %c0_14 = arith.constant 0 : index
    %c0_15 = arith.constant 0 : index
    %c0_16 = arith.constant 0 : index
    %24 = vector.load %arg6[%c0_13, %c0_14, %c0_15, %c0_16] : memref<1x8x8x1024xf32, #tpu.memory_space<vmem>>, vector<1x1x8x1024xf32>
    %25 = vector.shape_cast %24 : vector<1x1x8x1024xf32> to vector<8x1024xf32>
    %26 = vector.broadcast %23 : vector<8x1xf32> to vector<8x1024xf32>
    %27 = arith.mulf %26, %25 : vector<8x1024xf32>
    %28 = vector.extract_strided_slice %19 {offsets = [0, 1], sizes = [8, 1], strides = [1, 1]} : vector<8x8xf32> to vector<8x1xf32>
    %c0_17 = arith.constant 0 : index
    %c1 = arith.constant 1 : index
    %c0_18 = arith.constant 0 : index
    %c0_19 = arith.constant 0 : index
    %29 = vector.load %arg6[%c0_17, %c1, %c0_18, %c0_19] : memref<1x8x8x1024xf32, #tpu.memory_space<vmem>>, vector<1x1x8x1024xf32>
    %30 = vector.shape_cast %29 : vector<1x1x8x1024xf32> to vector<8x1024xf32>
    %31 = vector.broadcast %28 : vector<8x1xf32> to vector<8x1024xf32>
    %32 = arith.mulf %31, %30 : vector<8x1024xf32>
    %33 = arith.addf %27, %32 : vector<8x1024xf32>
    %34 = vector.extract_strided_slice %19 {offsets = [0, 2], sizes = [8, 1], strides = [1, 1]} : vector<8x8xf32> to vector<8x1xf32>
    %c0_20 = arith.constant 0 : index
    %c2 = arith.constant 2 : index
    %c0_21 = arith.constant 0 : index
    %c0_22 = arith.constant 0 : index
    %35 = vector.load %arg6[%c0_20, %c2, %c0_21, %c0_22] : memref<1x8x8x1024xf32, #tpu.memory_space<vmem>>, vector<1x1x8x1024xf32>
    %36 = vector.shape_cast %35 : vector<1x1x8x1024xf32> to vector<8x1024xf32>
    %37 = vector.broadcast %34 : vector<8x1xf32> to vector<8x1024xf32>
    %38 = arith.mulf %37, %36 : vector<8x1024xf32>
    %39 = arith.addf %33, %38 : vector<8x1024xf32>
    %40 = vector.extract_strided_slice %19 {offsets = [0, 3], sizes = [8, 1], strides = [1, 1]} : vector<8x8xf32> to vector<8x1xf32>
    %c0_23 = arith.constant 0 : index
    %c3 = arith.constant 3 : index
    %c0_24 = arith.constant 0 : index
    %c0_25 = arith.constant 0 : index
    %41 = vector.load %arg6[%c0_23, %c3, %c0_24, %c0_25] : memref<1x8x8x1024xf32, #tpu.memory_space<vmem>>, vector<1x1x8x1024xf32>
    %42 = vector.shape_cast %41 : vector<1x1x8x1024xf32> to vector<8x1024xf32>
    %43 = vector.broadcast %40 : vector<8x1xf32> to vector<8x1024xf32>
    %44 = arith.mulf %43, %42 : vector<8x1024xf32>
    %45 = arith.addf %39, %44 : vector<8x1024xf32>
    %46 = vector.extract_strided_slice %19 {offsets = [0, 4], sizes = [8, 1], strides = [1, 1]} : vector<8x8xf32> to vector<8x1xf32>
    %c0_26 = arith.constant 0 : index
    %c4 = arith.constant 4 : index
    %c0_27 = arith.constant 0 : index
    %c0_28 = arith.constant 0 : index
    %47 = vector.load %arg6[%c0_26, %c4, %c0_27, %c0_28] : memref<1x8x8x1024xf32, #tpu.memory_space<vmem>>, vector<1x1x8x1024xf32>
    %48 = vector.shape_cast %47 : vector<1x1x8x1024xf32> to vector<8x1024xf32>
    %49 = vector.broadcast %46 : vector<8x1xf32> to vector<8x1024xf32>
    %50 = arith.mulf %49, %48 : vector<8x1024xf32>
    %51 = arith.addf %45, %50 : vector<8x1024xf32>
    %52 = vector.extract_strided_slice %19 {offsets = [0, 5], sizes = [8, 1], strides = [1, 1]} : vector<8x8xf32> to vector<8x1xf32>
    %c0_29 = arith.constant 0 : index
    %c5 = arith.constant 5 : index
    %c0_30 = arith.constant 0 : index
    %c0_31 = arith.constant 0 : index
    %53 = vector.load %arg6[%c0_29, %c5, %c0_30, %c0_31] : memref<1x8x8x1024xf32, #tpu.memory_space<vmem>>, vector<1x1x8x1024xf32>
    %54 = vector.shape_cast %53 : vector<1x1x8x1024xf32> to vector<8x1024xf32>
    %55 = vector.broadcast %52 : vector<8x1xf32> to vector<8x1024xf32>
    %56 = arith.mulf %55, %54 : vector<8x1024xf32>
    %57 = arith.addf %51, %56 : vector<8x1024xf32>
    %58 = vector.extract_strided_slice %19 {offsets = [0, 6], sizes = [8, 1], strides = [1, 1]} : vector<8x8xf32> to vector<8x1xf32>
    %c0_32 = arith.constant 0 : index
    %c6 = arith.constant 6 : index
    %c0_33 = arith.constant 0 : index
    %c0_34 = arith.constant 0 : index
    %59 = vector.load %arg6[%c0_32, %c6, %c0_33, %c0_34] : memref<1x8x8x1024xf32, #tpu.memory_space<vmem>>, vector<1x1x8x1024xf32>
    %60 = vector.shape_cast %59 : vector<1x1x8x1024xf32> to vector<8x1024xf32>
    %61 = vector.broadcast %58 : vector<8x1xf32> to vector<8x1024xf32>
    %62 = arith.mulf %61, %60 : vector<8x1024xf32>
    %63 = arith.addf %57, %62 : vector<8x1024xf32>
    %64 = vector.extract_strided_slice %19 {offsets = [0, 7], sizes = [8, 1], strides = [1, 1]} : vector<8x8xf32> to vector<8x1xf32>
    %c0_35 = arith.constant 0 : index
    %c7 = arith.constant 7 : index
    %c0_36 = arith.constant 0 : index
    %c0_37 = arith.constant 0 : index
    %65 = vector.load %arg6[%c0_35, %c7, %c0_36, %c0_37] : memref<1x8x8x1024xf32, #tpu.memory_space<vmem>>, vector<1x1x8x1024xf32>
    %66 = vector.shape_cast %65 : vector<1x1x8x1024xf32> to vector<8x1024xf32>
    %67 = vector.broadcast %64 : vector<8x1xf32> to vector<8x1024xf32>
    %68 = arith.mulf %67, %66 : vector<8x1024xf32>
    %69 = arith.addf %63, %68 : vector<8x1024xf32>
    %c0_38 = arith.constant 0 : index
    %c0_39 = arith.constant 0 : index
    %c0_40 = arith.constant 0 : index
    %70 = vector.load %arg7[%c0_38, %c0_39, %c0_40] : memref<1x8x1024xf32, #tpu.memory_space<vmem>>, vector<1x8x1024xf32>
    %71 = vector.shape_cast %70 : vector<1x8x1024xf32> to vector<8x1024xf32>
    %72 = vector.shape_cast %69 : vector<8x1024xf32> to vector<1x8x1024xf32>
    tpu.vector_store %arg7[%c0_38, %c0_39, %c0_40], %72 {strides = array<i32>} : memref<1x8x1024xf32, #tpu.memory_space<vmem>>, vector<1x8x1024xf32>,
    return
  }
  func.func @transform_0(%arg0: i32, %arg1: i32) -> (i32, i32, i32) {
    %c0_i32 = arith.constant 0 : i32
    %c0_i32_0 = arith.constant 0 : i32
    %c0_i32_1 = arith.constant 0 : i32
    return %arg0, %c0_i32, %c0_i32_0 : i32, i32, i32
  }
  func.func @transform_1(%arg0: i32, %arg1: i32) -> (i32, i32) {
    %c0_i32 = arith.constant 0 : i32
    %c0_i32_0 = arith.constant 0 : i32
    %c0_i32_1 = arith.constant 0 : i32
    return %c0_i32, %c0_i32_0 : i32, i32
  }
  func.func @transform_2(%arg0: i32, %arg1: i32) -> (i32, i32) {
    %c0_i32 = arith.constant 0 : i32
    %c0_i32_0 = arith.constant 0 : i32
    %c0_i32_1 = arith.constant 0 : i32
    return %c0_i32, %c0_i32_0 : i32, i32
  }
  func.func @transform_3(%arg0: i32, %arg1: i32) -> (i32, i32, i32) {
    %c0_i32 = arith.constant 0 : i32
    %c0_i32_0 = arith.constant 0 : i32
    %c0_i32_1 = arith.constant 0 : i32
    return %arg0, %c0_i32, %c0_i32_0 : i32, i32, i32
  }
  func.func @transform_4(%arg0: i32, %arg1: i32) -> (i32, i32, i32, i32) {
    %c0_i32 = arith.constant 0 : i32
    %c0_i32_0 = arith.constant 0 : i32
    %c0_i32_1 = arith.constant 0 : i32
    return %arg0, %c0_i32, %c0_i32_0, %arg1 : i32, i32, i32, i32
  }
  func.func @transform_5(%arg0: i32, %arg1: i32) -> (i32, i32, i32) {
    %c0_i32 = arith.constant 0 : i32
    %c0_i32_0 = arith.constant 0 : i32
    return %arg0, %c0_i32, %arg1 : i32, i32, i32
  }
  func.func @transform_6(%arg0: i32, %arg1: i32) -> (i32, i32, i32) {
    %c0_i32 = arith.constant 0 : i32
    %c0_i32_0 = arith.constant 0 : i32
    %c0_i32_1 = arith.constant 0 : i32
    return %arg0, %c0_i32, %c0_i32_0 : i32, i32, i32
  }
}

</mosaic_0001>

<llo_original>
// kernel: tpu_custom_call.1
$region0: #{tpu_custom_call.1}
  #allocation0 [shape = 'u32[]', space=smem, size = 0x4, offset = 0x4, fixed_abs, tag = 'smem constant byte address 0x4 - core index']
  #allocation1 [shape = 'u32[144,128]{1,0:T(1,128)}', space=vmem, size = 0x12000, scoped, tag = 'internal scratch']
  %s0 = inlined_call_operand.hbm [shape: f32[2,8,32], index: 0, kind: input, shape index: {}]
  %s1 = inlined_call_operand.hbm [shape: f32[32,32], index: 1, kind: input, shape index: {}]
  %s2 = inlined_call_operand.vmem [shape: f32[1,32], index: 2, kind: input, shape index: {}]
  %s3 = inlined_call_operand.hbm [shape: f32[2,8,32], index: 3, kind: input, shape index: {}]
  %s4 = inlined_call_operand.hbm [shape: f32[2,8,8,1024], index: 4, kind: input, shape index: {}]
  %s5 = inlined_call_operand.hbm [shape: f32[2,8,1024], index: 5, kind: output, shape index: {0}]
  %s6 = inlined_call_operand.hbm [shape: f32[2,8,8], index: 6, kind: output, shape index: {1}]
  %7 = xla_tuple %s5, %s6
  %s8 = sld [smem:[#allocation0]]
  $region81: #{tpu_custom_call.1} parent=0
    _
  %s10 = ssub.s32 1, %s8
  %s11 = scalar_select 0, %s10, %s8
  $region1: #{tpu_custom_call.1} parent=0
    #allocation2 [shape = 'u8[8192]{0}', space=vmem, size = 0x2000, scoped, tag = 'input window, operand 0']
    #allocation3 [shape = 's32[2]{0}', space=sflag, size = 0x8, scoped, tag = 'scoped memory for tpu_custom_call.1']
    #allocation4 [shape = 's32[2]{0}', space=sflag, size = 0x8, scoped, tag = 'scoped memory for tpu_custom_call.1']
    #allocation5 [shape = 'u8[16384]{0}', space=vmem, size = 0x4000, scoped, tag = 'input window, operand 1, single buffered']
    #allocation6 [shape = 's32[1]{0}', space=sflag, size = 0x4, scoped, tag = 'scoped memory for tpu_custom_call.1']
    #allocation7 [shape = 'u8[8192]{0}', space=vmem, size = 0x2000, scoped, tag = 'input window, operand 3']
    #allocation8 [shape = 'u8[524288]{0}', space=vmem, size = 0x80000, scoped, tag = 'input window, operand 4']
    #allocation9 [shape = 'u8[65536]{0}', space=vmem, size = 0x10000, scoped, tag = 'output window, operand 0']
    #allocation10 [shape = 'u8[8192]{0}', space=vmem, size = 0x2000, scoped, tag = 'output window, operand 1']
    #allocation11 [shape = 's32[2]{0}', space=sflag, size = 0x8, scoped, tag = 'scoped memory for tpu_custom_call.1']
    %12 = vsyncpa [#allocation3], 0
    %s13 = scalar_lea.sflag [#allocation3], 1
    %14 = vsyncpa %s13, 0
    %15 = vsyncpa [#allocation6], 0
    %16 = vsyncpa [#allocation4], 0
    %s17 = scalar_lea.sflag [#allocation4], 1
    %18 = vsyncpa %s17, 0
    %19 = vsyncpa [#allocation11], 0
    %s20 = scalar_lea.sflag [#allocation11], 1
    %21 = vsyncpa %s20, 0
    loop: start=0, step=1, limit=4
    $region2: #{tpu_custom_call.1} parent=1 // loop_pre_header
      _
    $region3: #{tpu_custom_call.1} parent=1 // loop_header
      %s23 = sphi 0, %s27
      %p24 = scmp.ge.s32.totalorder %s23, 4
      %s30 = sphi 0, %s42
      %s31 = sphi 0, %s38
      %s32 = sphi 0, %s30
      %s33 = sphi 0, %s31
      %s34 = sphi 0, %s32
      %s35 = sphi 0, %s33
      %s45 = sphi 0, %s47
      %s48 = sphi 0, %s45
      %s49 = sphi 0, %s48
      %s65 = sphi 0, %s49
      %s69 = sphi 0, %s69
      %s71 = sphi 0, %s69
      %s72 = sphi 0, %s71
      %s86 = sphi 0, %s72
      %s90 = sphi 0, %s90
      %s92 = sphi 0, %s90
      %s93 = sphi 0, %s92
      %s107 = sphi 0, %s93
      %s113 = sphi 0, %s115
      %s116 = sphi 0, %s113
      %s117 = sphi 0, %s116
      %s133 = sphi 0, %s117
      %s141 = sphi 0, %s143
      %s144 = sphi 0, %s141
      %s145 = sphi 0, %s144
      %s161 = sphi 0, %s145
      %s169 = sphi 0, %s171
      %s172 = sphi 0, %s169
      %s173 = sphi 0, %s172
      %s189 = sphi 0, %s173
      %s195 = sphi 0, %s197
      %s198 = sphi 0, %s195
      %s199 = sphi 0, %s198
      %s215 = sphi 0, %s199
    $region4: #{tpu_custom_call.1} parent=1 // loop_header_branch
      %26 = sbr.rel (%p24) target = $region8
    $region5: #{tpu_custom_call.1} parent=1 // loop_body
      %s28 = ssub.s32 %s23, 1
      %s29 = ssub.s32 %s23, 2
      %s36 = sadd.s32 1, %s31
      %p37 = scmp.ge.s32.totalorder %s36, 1
      %s38 = scalar_select %p37, 0, %s36
      %s39 = sadd.s32 1, %s30
      %s40 = scalar_select %p37, %s39, %s30
      %p41 = scmp.ge.s32.totalorder %s40, 2
      %s42 = scalar_select %p41, 0, %s40
      %s43 = ssub.s32 %s30, %s42
      %p44 = scmp.eq.s32.totalorder %s43, 0
      %s46 = sadd.s32 %s45, 1
      %s47 = scalar_select %p44, %s45, %s46
      %p50 = pneg %p44
      %p51 = scmp.eq.s32.totalorder %s23, 1
      %p52 = por %p50, %p51
      %p53 = scmp.ne.s32.totalorder %s45, %s48
      %p54 = scmp.eq.s32.totalorder %s23, 0
      %p55 = por %p53, %p54
      %p56 = scmp.ne.s32.totalorder %s45, %s48
      %p57 = scmp.eq.s32.totalorder %s28, 1
      %p58 = por %p56, %p57
      %p59 = scmp.ne.s32.totalorder %s48, %s49
      %p60 = scmp.eq.s32.totalorder %s28, 0
      %p61 = por %p59, %p60
      %p62 = scmp.ne.s32.totalorder %s48, %s49
      %p63 = scmp.eq.s32.totalorder %s29, 1
      %p64 = por %p62, %p63
      %p66 = scmp.ne.s32.totalorder %s49, %s65
      %p67 = scmp.eq.s32.totalorder %s29, 0
      %p68 = por %p66, %p67
      %s70 = sadd.s32 %s69, 1
      %p73 = scmp.eq.s32.totalorder %s23, 1
      %p74 = scmp.ne.s32.totalorder %s69, %s71
      %p75 = scmp.eq.s32.totalorder %s23, 0
      %p76 = por %p74, %p75
      %p77 = scmp.ne.s32.totalorder %s69, %s71
      %p78 = scmp.eq.s32.totalorder %s28, 1
      %p79 = por %p77, %p78
      %p80 = scmp.ne.s32.totalorder %s71, %s72
      %p81 = scmp.eq.s32.totalorder %s28, 0
      %p82 = por %p80, %p81
      %p83 = scmp.ne.s32.totalorder %s71, %s72
      %p84 = scmp.eq.s32.totalorder %s29, 1
      %p85 = por %p83, %p84
      %p87 = scmp.ne.s32.totalorder %s72, %s86
      %p88 = scmp.eq.s32.totalorder %s29, 0
      %p89 = por %p87, %p88
      %s91 = sadd.s32 %s90, 1
      %p94 = scmp.eq.s32.totalorder %s23, 1
      %p95 = scmp.ne.s32.totalorder %s90, %s92
      %p96 = scmp.eq.s32.totalorder %s23, 0
      %p97 = por %p95, %p96
      %p98 = scmp.ne.s32.totalorder %s90, %s92
      %p99 = scmp.eq.s32.totalorder %s28, 1
      %p100 = por %p98, %p99
      %p101 = scmp.ne.s32.totalorder %s92, %s93
      %p102 = scmp.eq.s32.totalorder %s28, 0
      %p103 = por %p101, %p102
      %p104 = scmp.ne.s32.totalorder %s92, %s93
      %p105 = scmp.eq.s32.totalorder %s29, 1
      %p106 = por %p104, %p105
      %p108 = scmp.ne.s32.totalorder %s93, %s107
      %p109 = scmp.eq.s32.totalorder %s29, 0
      %p110 = por %p108, %p109
      %s111 = ssub.s32 %s30, %s42
      %p112 = scmp.eq.s32.totalorder %s111, 0
      %s114 = sadd.s32 %s113, 1
      %s115 = scalar_select %p112, %s113, %s114
      %p118 = pneg %p112
      %p119 = scmp.eq.s32.totalorder %s23, 1
      %p120 = por %p118, %p119
      %p121 = scmp.ne.s32.totalorder %s113, %s116
      %p122 = scmp.eq.s32.totalorder %s23, 0
      %p123 = por %p121, %p122
      %p124 = scmp.ne.s32.totalorder %s113, %s116
      %p125 = scmp.eq.s32.totalorder %s28, 1
      %p126 = por %p124, %p125
      %p127 = scmp.ne.s32.totalorder %s116, %s117
      %p128 = scmp.eq.s32.totalorder %s28, 0
      %p129 = por %p127, %p128
      %p130 = scmp.ne.s32.totalorder %s116, %s117
      %p131 = scmp.eq.s32.totalorder %s29, 1
      %p132 = por %p130, %p131
      %p134 = scmp.ne.s32.totalorder %s117, %s133
      %p135 = scmp.eq.s32.totalorder %s29, 0
      %p136 = por %p134, %p135
      %s137 = ssub.s32 %s30, %s42
      %s138 = ssub.s32 %s31, %s38
      %s139 = sor.u32 %s137, %s138
      %p140 = scmp.eq.s32.totalorder %s139, 0
      %s142 = sadd.s32 %s141, 1
      %s143 = scalar_select %p140, %s141, %s142
      %p146 = pneg %p140
      %p147 = scmp.eq.s32.totalorder %s23, 1
      %p148 = por %p146, %p147
      %p149 = scmp.ne.s32.totalorder %s141, %s144
      %p150 = scmp.eq.s32.totalorder %s23, 0
      %p151 = por %p149, %p150
      %p152 = scmp.ne.s32.totalorder %s141, %s144
      %p153 = scmp.eq.s32.totalorder %s28, 1
      %p154 = por %p152, %p153
      %p155 = scmp.ne.s32.totalorder %s144, %s145
      %p156 = scmp.eq.s32.totalorder %s28, 0
      %p157 = por %p155, %p156
      %p158 = scmp.ne.s32.totalorder %s144, %s145
      %p159 = scmp.eq.s32.totalorder %s29, 1
      %p160 = por %p158, %p159
      %p162 = scmp.ne.s32.totalorder %s145, %s161
      %p163 = scmp.eq.s32.totalorder %s29, 0
      %p164 = por %p162, %p163
      %s165 = ssub.s32 %s30, %s42
      %s166 = ssub.s32 %s31, %s38
      %s167 = sor.u32 %s165, %s166
      %p168 = scmp.eq.s32.totalorder %s167, 0
      %s170 = sadd.s32 %s169, 1
      %s171 = scalar_select %p168, %s169, %s170
      %p174 = pneg %p168
      %p175 = scmp.eq.s32.totalorder %s23, 1
      %p176 = por %p174, %p175
      %p177 = scmp.ne.s32.totalorder %s169, %s172
      %p178 = scmp.eq.s32.totalorder %s23, 0
      %p179 = por %p177, %p178
      %p180 = scmp.ne.s32.totalorder %s169, %s172
      %p181 = scmp.eq.s32.totalorder %s28, 1
      %p182 = por %p180, %p181
      %p183 = scmp.ne.s32.totalorder %s172, %s173
      %p184 = scmp.eq.s32.totalorder %s28, 0
      %p185 = por %p183, %p184
      %p186 = scmp.ne.s32.totalorder %s172, %s173
      %p187 = scmp.eq.s32.totalorder %s29, 1
      %p188 = por %p186, %p187
      %p190 = scmp.ne.s32.totalorder %s173, %s189
      %p191 = scmp.eq.s32.totalorder %s29, 0
      %p192 = por %p190, %p191
      %s193 = ssub.s32 %s30, %s42
      %p194 = scmp.eq.s32.totalorder %s193, 0
      %s196 = sadd.s32 %s195, 1
      %s197 = scalar_select %p194, %s195, %s196
      %p200 = pneg %p194
      %p201 = scmp.eq.s32.totalorder %s23, 1
      %p202 = por %p200, %p201
      %p203 = scmp.ne.s32.totalorder %s195, %s198
      %p204 = scmp.eq.s32.totalorder %s23, 0
      %p205 = por %p203, %p204
      %p206 = scmp.ne.s32.totalorder %s195, %s198
      %p207 = scmp.eq.s32.totalorder %s28, 1
      %p208 = por %p206, %p207
      %p209 = scmp.ne.s32.totalorder %s198, %s199
      %p210 = scmp.eq.s32.totalorder %s28, 0
      %p211 = por %p209, %p210
      %p212 = scmp.ne.s32.totalorder %s198, %s199
      %p213 = scmp.eq.s32.totalorder %s29, 1
      %p214 = por %p212, %p213
      %p216 = scmp.ne.s32.totalorder %s199, %s215
      %p217 = scmp.eq.s32.totalorder %s29, 0
      %p218 = por %p216, %p217
      %p219 = scmp.le.s32.totalorder 1, %s23
      %p220 = scmp.lt.s32.totalorder %s23, 3
      %p221 = pnand %p219, %p220
      %p222 = pneg %p221
      // Predicated region
      $region9: #{tpu_custom_call.1} parent=5 // pred_check
        _
      $region10: #{tpu_custom_call.1} parent=5 // pred_check_branch
        %224 = sbr.rel (%p221) target = $region12
      $region11: #{tpu_custom_call.1} parent=5 // pred_region
        %s225 = ssub.s32 %s23, 1
        // Predicated region
        $region13: #{tpu_custom_call.1} parent=11 // pred_check
          %p226 = pneg %p82
        $region14: #{tpu_custom_call.1} parent=11 // pred_check_branch
          %228 = sbr.rel (%p226) target = $region16
        $region15: #{tpu_custom_call.1} parent=11 // pred_region
          %s230 = ssub.s32 512, 512
          %231 = vsyncadd [#allocation6], %s230
          %s232 = sshll.u32 [#allocation5], 4
          %s233 = int_to_ptr.vmem [resolvable:$true] %s232
          %238 = dma.hbm_to_vmem [thread:$0]  %s1, 512, %s233, [#allocation6], 128, 128, 8
        $region16: #{tpu_custom_call.1} parent=11 // pred_fallthru
          _
        // Predicated region
        $region17: #{tpu_custom_call.1} parent=11 // pred_check
          %p239 = pneg %p103
        $region18: #{tpu_custom_call.1} parent=11 // pred_check_branch
          %241 = sbr.rel (%p239) target = $region20
        $region19: #{tpu_custom_call.1} parent=11 // pred_region
          _
        $region20: #{tpu_custom_call.1} parent=11 // pred_fallthru
          _
      $region12: #{tpu_custom_call.1} parent=5 // pred_fallthru
        _
      %p242 = scmp.lt.s32.totalorder %s23, 2
      // Predicated region
      $region21: #{tpu_custom_call.1} parent=5 // pred_check
        %p243 = pneg %p242
      $region22: #{tpu_custom_call.1} parent=5 // pred_check_branch
        %245 = sbr.rel (%p243) target = $region24
      $region23: #{tpu_custom_call.1} parent=5 // pred_region
        // Predicated region
        $region25: #{tpu_custom_call.1} parent=23 // pred_check
          %p246 = pneg %p55
        $region26: #{tpu_custom_call.1} parent=23 // pred_check_branch
          %248 = sbr.rel (%p246) target = $region28
        $region27: #{tpu_custom_call.1} parent=23 // pred_region
          %s249 = sand.u32 %s23, 1
          %s250 = scalar_lea.sflag [#allocation3], %s249
          %s251 = sand.u32 %s45, 1
          %s252 = smul.addr %s251, 8
          %s253 = scalar_lea.vmem [#allocation2], %s252
          %s255 = ssub.s32 128, 128
          %256 = vsyncadd %s250, %s255
          %s257 = smul.addr %s30, 128
          %s258 = scalar_lea.hbm %s0, %s257
          %s260 = sshll.u32 %s253, 4
          %s261 = int_to_ptr.vmem [resolvable:$true] %s260
          %263 = dma.hbm_to_vmem [thread:$0]  %s258, 128, %s261, %s250
        $region28: #{tpu_custom_call.1} parent=23 // pred_fallthru
          _
        // Predicated region
        $region29: #{tpu_custom_call.1} parent=23 // pred_check
          %p264 = pneg %p123
        $region30: #{tpu_custom_call.1} parent=23 // pred_check_branch
          %266 = sbr.rel (%p264) target = $region32
        $region31: #{tpu_custom_call.1} parent=23 // pred_region
          %s267 = sand.u32 %s23, 1
          %s268 = scalar_lea.sflag [#allocation3], %s267
          %s269 = sand.u32 %s113, 1
          %s270 = smul.addr %s269, 8
          %s271 = scalar_lea.vmem [#allocation7], %s270
          %s273 = ssub.s32 128, 128
          %274 = vsyncadd %s268, %s273
          %s275 = smul.addr %s30, 128
          %s276 = scalar_lea.hbm %s3, %s275
          %s278 = sshll.u32 %s271, 4
          %s279 = int_to_ptr.vmem [resolvable:$true] %s278
          %281 = dma.hbm_to_vmem [thread:$0]  %s276, 128, %s279, %s268
        $region32: #{tpu_custom_call.1} parent=23 // pred_fallthru
          _
        // Predicated region
        $region33: #{tpu_custom_call.1} parent=23 // pred_check
          %p282 = pneg %p151
        $region34: #{tpu_custom_call.1} parent=23 // pred_check_branch
          %284 = sbr.rel (%p282) target = $region36
        $region35: #{tpu_custom_call.1} parent=23 // pred_region
          %s285 = sand.u32 %s23, 1
          %s286 = scalar_lea.sflag [#allocation3], %s285
          %s287 = sand.u32 %s141, 1
          %s288 = smul.addr %s287, 512
          %s289 = scalar_lea.vmem [#allocation8], %s288
          %s290 = smul.u32 8, %s31
          %s292 = ssub.s32 8192, 8192
          %293 = vsyncadd %s286, %s292
          %s294 = smul.addr %s30, 64
          %s295 = sadd.s32 %s290, %s294
          %s296 = smul.addr %s295, 128
          %s297 = scalar_lea.hbm %s4, %s296
          %s298 = sshll.u32 %s289, 4
          %s299 = int_to_ptr.vmem [resolvable:$true] %s298
          %304 = dma.hbm_to_vmem [thread:$0]  %s297, 8192, %s299, %s286, 1024, 1024, 64
        $region36: #{tpu_custom_call.1} parent=23 // pred_fallthru
          _
      $region24: #{tpu_custom_call.1} parent=5 // pred_fallthru
        _
      %p305 = scmp.le.s32.totalorder 1, %s23
      %p306 = scmp.lt.s32.totalorder %s23, 3
      %p307 = pnand %p305, %p306
      %p308 = pneg %p307
      // Predicated region
      $region37: #{tpu_custom_call.1} parent=5 // pred_check
        _
      $region38: #{tpu_custom_call.1} parent=5 // pred_check_branch
        %310 = sbr.rel (%p307) target = $region40
      $region39: #{tpu_custom_call.1} parent=5 // pred_region
        %s311 = ssub.s32 %s23, 1
        %s312 = sand.u32 %s28, 1
        %s313 = scalar_lea.sflag [#allocation3], %s312
        %s314 = sand.u32 %s48, 1
        %s315 = smul.addr %s314, 8
        %s316 = scalar_lea.vmem [#allocation2], %s315
        // Predicated region
        $region41: #{tpu_custom_call.1} parent=39 // pred_check
          %p317 = pneg %p61
        $region42: #{tpu_custom_call.1} parent=39 // pred_check_branch
          %319 = sbr.rel (%p317) target = $region44
        $region43: #{tpu_custom_call.1} parent=39 // pred_region
          %320 = dma.done %s313, 128
        $region44: #{tpu_custom_call.1} parent=39 // pred_fallthru
          _
        // Predicated region
        $region45: #{tpu_custom_call.1} parent=39 // pred_check
          %p321 = pneg %p82
        $region46: #{tpu_custom_call.1} parent=39 // pred_check_branch
          %323 = sbr.rel (%p321) target = $region48
        $region47: #{tpu_custom_call.1} parent=39 // pred_region
          %324 = dma.done [#allocation6], 512
        $region48: #{tpu_custom_call.1} parent=39 // pred_fallthru
          _
        %s325 = sand.u32 %s28, 1
        %s326 = scalar_lea.sflag [#allocation3], %s325
        %s327 = sand.u32 %s116, 1
        %s328 = smul.addr %s327, 8
        %s329 = scalar_lea.vmem [#allocation7], %s328
        // Predicated region
        $region49: #{tpu_custom_call.1} parent=39 // pred_check
          %p330 = pneg %p129
        $region50: #{tpu_custom_call.1} parent=39 // pred_check_branch
          %332 = sbr.rel (%p330) target = $region52
        $region51: #{tpu_custom_call.1} parent=39 // pred_region
          %333 = dma.done %s326, 128
        $region52: #{tpu_custom_call.1} parent=39 // pred_fallthru
          _
        %s334 = sand.u32 %s28, 1
        %s335 = scalar_lea.sflag [#allocation3], %s334
        %s336 = sand.u32 %s144, 1
        %s337 = smul.addr %s336, 512
        %s338 = scalar_lea.vmem [#allocation8], %s337
        // Predicated region
        $region53: #{tpu_custom_call.1} parent=39 // pred_check
          %p339 = pneg %p157
        $region54: #{tpu_custom_call.1} parent=39 // pred_check_branch
          %341 = sbr.rel (%p339) target = $region56
        $region55: #{tpu_custom_call.1} parent=39 // pred_region
          %342 = dma.done %s335, 8192
        $region56: #{tpu_custom_call.1} parent=39 // pred_fallthru
          _
        %s343 = sand.u32 %s28, 1
        %s344 = scalar_lea.sflag [#allocation3], %s343
        %s345 = sand.u32 %s48, 1
        %s346 = smul.addr %s345, 8
        %s347 = scalar_lea.vmem [#allocation2], %s346
        %p348 = pneg %p61
        %p349 = pneg %p58
        %p350 = pneg %p82
        %p351 = pneg %p79
        %p352 = pneg %p103
        %p353 = pneg %p100
        %s354 = sand.u32 %s28, 1
        %s355 = scalar_lea.sflag [#allocation3], %s354
        %s356 = sand.u32 %s116, 1
        %s357 = smul.addr %s356, 8
        %s358 = scalar_lea.vmem [#allocation7], %s357
        %p359 = pneg %p129
        %p360 = pneg %p126
        %s361 = sand.u32 %s28, 1
        %s362 = scalar_lea.sflag [#allocation3], %s361
        %s363 = sand.u32 %s144, 1
        %s364 = smul.addr %s363, 512
        %s365 = scalar_lea.vmem [#allocation8], %s364
        %p366 = pneg %p157
        %p367 = pneg %p154
        %p368 = pneg %p185
        %p369 = pneg %p182
        %s370 = sand.u32 %s172, 1
        %s371 = scalar_lea.sflag [#allocation4], %s370
        %s372 = sand.u32 %s172, 1
        %s373 = smul.addr %s372, 64
        %s374 = scalar_lea.vmem [#allocation9], %s373
        %p375 = pneg %p211
        %p376 = pneg %p208
        %s377 = sand.u32 %s198, 1
        %s378 = scalar_lea.sflag [#allocation11], %s377
        %s379 = sand.u32 %s198, 1
        %s380 = smul.addr %s379, 8
        %s381 = scalar_lea.vmem [#allocation10], %s380
        %s382 = smul.u32 8, %s33
        %s383 = smul.u32 8, %s33
        %v384 = vld [vmem:[#allocation5] sm:$0xff]
        %v385 = vld [vmem:[#allocation5 + $0x8] sm:$0xff]
        %v386 = vld [vmem:[#allocation5 + $0x10] sm:$0xff]
        %v387 = vld [vmem:[#allocation5 + $0x18] sm:$0xff]
        %v388 = vld [vmem:[%s2] sm:$0x1]
        %v389 = vld [vmem:[%s316] sm:$0xff]
        %v391 = vlaneseq
        %v392 = vshrl.u32 %v391, 7
        %v393 = vsub.s32 0, %v392
        %v394 = vrot.slane %v388, %v393
        %vm396 = vcmask 261120
        %v398 = vsel %vm396, %v389, 0
        %400 = vmatprep.subr.mxu0 0.0
        %401 = vmatpush1.msra.mxu0 %v384
        %402 = vmatprep.subr.mxu0 0.0
        %403 = vmatpush1.msra.mxu0 %v385
        %404 = vmatprep.subr.mxu0 0.0
        %405 = vmatpush1.msra.mxu0 %v386
        %406 = vmatprep.subr.mxu0 0.0
        %407 = vmatpush1.msra.mxu0 %v387
        %408 = vmatprep.subr.mxu0 0.0
        %409 = vmatpush1.msra.mxu0 0.0
        %410 = vmatprep.subr.mxu0 0.0
        %411 = vmatpush1.msra.mxu0 0.0
        %412 = vmatprep.subr.mxu0 0.0
        %413 = vmatpush1.msra.mxu0 0.0
        %414 = vmatprep.subr.mxu0 0.0
        %415 = vmatpush1.msra.mxu0 0.0
        %416 = vmatprep.subr.mxu0 0.0
        %417 = vmatpush1.msra.mxu0 0.0
        %418 = vmatprep.subr.mxu0 0.0
        %419 = vmatpush1.msra.mxu0 0.0
        %420 = vmatprep.subr.mxu0 0.0
        %421 = vmatpush1.msra.mxu0 0.0
        %422 = vmatprep.subr.mxu0 0.0
        %423 = vmatpush1.msra.mxu0 0.0
        %424 = vmatprep.subr.mxu0 0.0
        %425 = vmatpush1.msra.mxu0 0.0
        %426 = vmatprep.subr.mxu0 0.0
        %427 = vmatpush1.msra.mxu0 0.0
        %428 = vmatprep.subr.mxu0 0.0
        %429 = vmatpush1.msra.mxu0 0.0
        %430 = vmatprep.subr.mxu0 0.0
        %431 = vmatpush1.msra.mxu0 0.0
        %432 = vmatprep.subr.mxu0 0.0
        %433 = vmatpush1.msra.mxu0 0.0
        %434 = vmatprep.subr.mxu0 0.0
        %435 = vmatpush1.msra.mxu0 0.0
        %436 = vmatprep.subr.mxu0 0.0
        %437 = vmatpush1.msra.mxu0 0.0
        %438 = vmatprep.subr.mxu0 0.0
        %439 = vmatpush1.msra.mxu0 0.0
        %440 = vmatprep.subr.mxu0 0.0
        %441 = vmatpush1.msra.mxu0 0.0
        %442 = vmatprep.subr.mxu0 0.0
        %443 = vmatpush1.msra.mxu0 0.0
        %444 = vmatprep.subr.mxu0 0.0
        %445 = vmatpush1.msra.mxu0 0.0
        %446 = vmatprep.subr.mxu0 0.0
        %447 = vmatpush1.msra.mxu0 0.0
        %448 = vmatprep.subr.mxu0 0.0
        %449 = vmatpush1.msra.mxu0 0.0
        %450 = vmatprep.subr.mxu0 0.0
        %451 = vmatpush1.msra.mxu0 0.0
        %452 = vmatprep.subr.mxu0 0.0
        %453 = vmatpush1.msra.mxu0 0.0
        %454 = vmatprep.subr.mxu0 0.0
        %455 = vmatpush1.msra.mxu0 0.0
        %456 = vmatprep.subr.mxu0 0.0
        %457 = vmatpush1.msra.mxu0 0.0
        %458 = vmatprep.subr.mxu0 0.0
        %459 = vmatpush1.msra.mxu0 0.0
        %460 = vmatprep.subr.mxu0 0.0
        %461 = vmatpush1.msra.mxu0 0.0
        %462 = vmatprep.subr.mxu0 0.0
        %463 = vmatpush1.msra.mxu0 0.0
        %464 = vmatprep.mubr.f32.mxu0 0.0
        %465 = vmatmul.mubr.f32.gmra.mrb[0].mxu0 %v398
        %v466 = vpop.f32.mrb[0].mxu0
        %v467 = vadd.f32 %v394, %v466
        %v468 = vpop.f32.mrb[0].mxu0
        %469 = vdwg.mxu0
        %v470 = vld [vmem:[%s329] sm:$0xff]
        %v472 = vsel %vm396, %v467, 0
        %v475 = vsel %vm396, %v470, 0
        %477 = vmatprep.subr.mxu0 0.0
        %478 = vmatpush1.xpose.msra.mxu0 %v475
        %479 = vmatprep.subr.mxu0 0.0
        %480 = vmatpush1.xpose.msra.mxu0 0.0
        %481 = vmatprep.subr.mxu0 0.0
        %482 = vmatpush1.xpose.msra.mxu0 0.0
        %483 = vmatprep.subr.mxu0 0.0
        %484 = vmatpush1.xpose.msra.mxu0 0.0
        %485 = vmatprep.subr.mxu0 0.0
        %486 = vmatpush1.xpose.msra.mxu0 0.0
        %487 = vmatprep.subr.mxu0 0.0
        %488 = vmatpush1.xpose.msra.mxu0 0.0
        %489 = vmatprep.subr.mxu0 0.0
        %490 = vmatpush1.xpose.msra.mxu0 0.0
        %491 = vmatprep.subr.mxu0 0.0
        %492 = vmatpush1.xpose.msra.mxu0 0.0
        %493 = vmatprep.subr.mxu0 0.0
        %494 = vmatpush1.xpose.msra.mxu0 0.0
        %495 = vmatprep.subr.mxu0 0.0
        %496 = vmatpush1.xpose.msra.mxu0 0.0
        %497 = vmatprep.subr.mxu0 0.0
        %498 = vmatpush1.xpose.msra.mxu0 0.0
        %499 = vmatprep.subr.mxu0 0.0
        %500 = vmatpush1.xpose.msra.mxu0 0.0
        %501 = vmatprep.subr.mxu0 0.0
        %502 = vmatpush1.xpose.msra.mxu0 0.0
        %503 = vmatprep.subr.mxu0 0.0
        %504 = vmatpush1.xpose.msra.mxu0 0.0
        %505 = vmatprep.subr.mxu0 0.0
        %506 = vmatpush1.xpose.msra.mxu0 0.0
        %507 = vmatprep.subr.mxu0 0.0
        %508 = vmatpush1.xpose.msra.mxu0 0.0
        %509 = vmatprep.subr.mxu0 0.0
        %510 = vmatpush1.xpose.msra.mxu0 0.0
        %511 = vmatprep.subr.mxu0 0.0
        %512 = vmatpush1.xpose.msra.mxu0 0.0
        %513 = vmatprep.subr.mxu0 0.0
        %514 = vmatpush1.xpose.msra.mxu0 0.0
        %515 = vmatprep.subr.mxu0 0.0
        %516 = vmatpush1.xpose.msra.mxu0 0.0
        %517 = vmatprep.subr.mxu0 0.0
        %518 = vmatpush1.xpose.msra.mxu0 0.0
        %519 = vmatprep.subr.mxu0 0.0
        %520 = vmatpush1.xpose.msra.mxu0 0.0
        %521 = vmatprep.subr.mxu0 0.0
        %522 = vmatpush1.xpose.msra.mxu0 0.0
        %523 = vmatprep.subr.mxu0 0.0
        %524 = vmatpush1.xpose.msra.mxu0 0.0
        %525 = vmatprep.subr.mxu0 0.0
        %526 = vmatpush1.xpose.msra.mxu0 0.0
        %527 = vmatprep.subr.mxu0 0.0
        %528 = vmatpush1.xpose.msra.mxu0 0.0
        %529 = vmatprep.subr.mxu0 0.0
        %530 = vmatpush1.xpose.msra.mxu0 0.0
        %531 = vmatprep.subr.mxu0 0.0
        %532 = vmatpush1.xpose.msra.mxu0 0.0
        %533 = vmatprep.subr.mxu0 0.0
        %534 = vmatpush1.xpose.msra.mxu0 0.0
        %535 = vmatprep.subr.mxu0 0.0
        %536 = vmatpush1.xpose.msra.mxu0 0.0
        %537 = vmatprep.subr.mxu0 0.0
        %538 = vmatpush1.xpose.msra.mxu0 0.0
        %539 = vmatprep.subr.mxu0 0.0
        %540 = vmatpush1.xpose.msra.mxu0 0.0
        %541 = vmatprep.mubr.f32.mxu0 0.0
        %542 = vmatmul.mubr.f32.gmra.mrb[0].mxu0 %v472
        %v543 = vpop.f32.mrb[0].mxu0
        %v544 = vadd.f32 0.0, %v543
        %v545 = vpop.f32.mrb[0].mxu0
        %546 = vdwg.mxu0
        %vm547 = vcmask 64512
        %v548 = vsel %vm547, %v544, -inf
        %549 = vmax.xlane.f32.xlu0 %v548
        %v550 = vpop.xlane.xlu0 %549
        %v551 = vsub.f32 %v544, %v550
        %v552 = vmul.f32 %v551, 1.442695
        %v553 = vpow.pop %v552
        %v554 = vsel %vm547, %v553, 0.0
        %555 = vadd.xlane.f32.xlu0 %v554
        %v556 = vpop.xlane.xlu0 %555
        %v557 = vrcp.pop %v556
        %v558 = vmul.f32 %v553, %v557
        %p559 = scmp.eq.s32.totalorder %s33, 0
        // Predicated region
        $region57: #{tpu_custom_call.1} parent=39 // pred_check
          %p560 = pneg %p559
        $region58: #{tpu_custom_call.1} parent=39 // pred_check_branch
          %562 = sbr.rel (%p560) target = $region60
        $region59: #{tpu_custom_call.1} parent=39 // pred_region
          %563 = vst.msk [vmem:[%s381] sm:$0xff] %vm547, %v558
        $region60: #{tpu_custom_call.1} parent=39 // pred_fallthru
          _
        %v564 = vld [vmem:[%s338] sm:$0xff]
        %v565 = vld [vmem:[%s338 + $0x8] sm:$0xff]
        %v566 = vld [vmem:[%s338 + $0x10] sm:$0xff]
        %v567 = vld [vmem:[%s338 + $0x18] sm:$0xff]
        %v568 = vld [vmem:[%s338 + $0x20] sm:$0xff]
        %v569 = vld [vmem:[%s338 + $0x28] sm:$0xff]
        %v570 = vld [vmem:[%s338 + $0x30] sm:$0xff]
        %v571 = vld [vmem:[%s338 + $0x38] sm:$0xff]
        %573 = vset.pattern.permute.xlu0 0
        %574 = vperm.xlu0 %573, %v558
        %v575 = vpop.permute.xlu0 %574
        %v577 = vmul.f32 %v575, %v564
        %v578 = vmul.f32 %v575, %v565
        %v579 = vmul.f32 %v575, %v566
        %v580 = vmul.f32 %v575, %v567
        %v581 = vmul.f32 %v575, %v568
        %v582 = vmul.f32 %v575, %v569
        %v583 = vmul.f32 %v575, %v570
        %v584 = vmul.f32 %v575, %v571
        %s585 = scalar_lea.vmem %s338, 64 [#allocation8]
        %v586 = vld [vmem:[%s585] sm:$0xff]
        %v587 = vld [vmem:[%s585 + $0x8] sm:$0xff]
        %v588 = vld [vmem:[%s585 + $0x10] sm:$0xff]
        %v589 = vld [vmem:[%s585 + $0x18] sm:$0xff]
        %v590 = vld [vmem:[%s585 + $0x20] sm:$0xff]
        %v591 = vld [vmem:[%s585 + $0x28] sm:$0xff]
        %v592 = vld [vmem:[%s585 + $0x30] sm:$0xff]
        %v593 = vld [vmem:[%s585 + $0x38] sm:$0xff]
        %594 = vset.pattern.permute.xlu0 1
        %595 = vperm.xlu0 %594, %v558
        %v596 = vpop.permute.xlu0 %595
        %v598 = vmul.f32 %v596, %v586
        %v599 = vmul.f32 %v596, %v587
        %v600 = vmul.f32 %v596, %v588
        %v601 = vmul.f32 %v596, %v589
        %v602 = vmul.f32 %v596, %v590
        %v603 = vmul.f32 %v596, %v591
        %v604 = vmul.f32 %v596, %v592
        %v605 = vmul.f32 %v596, %v593
        %v606 = vadd.f32 %v577, %v598
        %v607 = vadd.f32 %v578, %v599
        %v608 = vadd.f32 %v579, %v600
        %v609 = vadd.f32 %v580, %v601
        %v610 = vadd.f32 %v581, %v602
        %v611 = vadd.f32 %v582, %v603
        %v612 = vadd.f32 %v583, %v604
        %v613 = vadd.f32 %v584, %v605
        %s614 = scalar_lea.vmem %s338, 128 [#allocation8]
        %v615 = vld [vmem:[%s614] sm:$0xff]
        %v616 = vld [vmem:[%s614 + $0x8] sm:$0xff]
        %v617 = vld [vmem:[%s614 + $0x10] sm:$0xff]
        %v618 = vld [vmem:[%s614 + $0x18] sm:$0xff]
        %v619 = vld [vmem:[%s614 + $0x20] sm:$0xff]
        %v620 = vld [vmem:[%s614 + $0x28] sm:$0xff]
        %v621 = vld [vmem:[%s614 + $0x30] sm:$0xff]
        %v622 = vld [vmem:[%s614 + $0x38] sm:$0xff]
        %623 = vset.pattern.permute.xlu0 2
        %624 = vperm.xlu0 %623, %v558
        %v625 = vpop.permute.xlu0 %624
        %v627 = vmul.f32 %v625, %v615
        %v628 = vmul.f32 %v625, %v616
        %v629 = vmul.f32 %v625, %v617
        %v630 = vmul.f32 %v625, %v618
        %v631 = vmul.f32 %v625, %v619
        %v632 = vmul.f32 %v625, %v620
        %v633 = vmul.f32 %v625, %v621
        %v634 = vmul.f32 %v625, %v622
        %v635 = vadd.f32 %v606, %v627
        %v636 = vadd.f32 %v607, %v628
        %v637 = vadd.f32 %v608, %v629
        %v638 = vadd.f32 %v609, %v630
        %v639 = vadd.f32 %v610, %v631
        %v640 = vadd.f32 %v611, %v632
        %v641 = vadd.f32 %v612, %v633
        %v642 = vadd.f32 %v613, %v634
        %s643 = scalar_lea.vmem %s338, 192 [#allocation8]
        %v644 = vld [vmem:[%s643] sm:$0xff]
        %v645 = vld [vmem:[%s643 + $0x8] sm:$0xff]
        %v646 = vld [vmem:[%s643 + $0x10] sm:$0xff]
        %v647 = vld [vmem:[%s643 + $0x18] sm:$0xff]
        %v648 = vld [vmem:[%s643 + $0x20] sm:$0xff]
        %v649 = vld [vmem:[%s643 + $0x28] sm:$0xff]
        %v650 = vld [vmem:[%s643 + $0x30] sm:$0xff]
        %v651 = vld [vmem:[%s643 + $0x38] sm:$0xff]
        %652 = vset.pattern.permute.xlu0 3
        %653 = vperm.xlu0 %652, %v558
        %v654 = vpop.permute.xlu0 %653
        %v656 = vmul.f32 %v654, %v644
        %v657 = vmul.f32 %v654, %v645
        %v658 = vmul.f32 %v654, %v646
        %v659 = vmul.f32 %v654, %v647
        %v660 = vmul.f32 %v654, %v648
        %v661 = vmul.f32 %v654, %v649
        %v662 = vmul.f32 %v654, %v650
        %v663 = vmul.f32 %v654, %v651
        %v664 = vadd.f32 %v635, %v656
        %v665 = vadd.f32 %v636, %v657
        %v666 = vadd.f32 %v637, %v658
        %v667 = vadd.f32 %v638, %v659
        %v668 = vadd.f32 %v639, %v660
        %v669 = vadd.f32 %v640, %v661
        %v670 = vadd.f32 %v641, %v662
        %v671 = vadd.f32 %v642, %v663
        %s672 = scalar_lea.vmem %s338, 256 [#allocation8]
        %v673 = vld [vmem:[%s672] sm:$0xff]
        %v674 = vld [vmem:[%s672 + $0x8] sm:$0xff]
        %v675 = vld [vmem:[%s672 + $0x10] sm:$0xff]
        %v676 = vld [vmem:[%s672 + $0x18] sm:$0xff]
        %v677 = vld [vmem:[%s672 + $0x20] sm:$0xff]
        %v678 = vld [vmem:[%s672 + $0x28] sm:$0xff]
        %v679 = vld [vmem:[%s672 + $0x30] sm:$0xff]
        %v680 = vld [vmem:[%s672 + $0x38] sm:$0xff]
        %681 = vset.pattern.permute.xlu0 4
        %682 = vperm.xlu0 %681, %v558
        %v683 = vpop.permute.xlu0 %682
        %v685 = vmul.f32 %v683, %v673
        %v686 = vmul.f32 %v683, %v674
        %v687 = vmul.f32 %v683, %v675
        %v688 = vmul.f32 %v683, %v676
        %v689 = vmul.f32 %v683, %v677
        %v690 = vmul.f32 %v683, %v678
        %v691 = vmul.f32 %v683, %v679
        %v692 = vmul.f32 %v683, %v680
        %v693 = vadd.f32 %v664, %v685
        %v694 = vadd.f32 %v665, %v686
        %v695 = vadd.f32 %v666, %v687
        %v696 = vadd.f32 %v667, %v688
        %v697 = vadd.f32 %v668, %v689
        %v698 = vadd.f32 %v669, %v690
        %v699 = vadd.f32 %v670, %v691
        %v700 = vadd.f32 %v671, %v692
        %s701 = scalar_lea.vmem %s338, 320 [#allocation8]
        %v702 = vld [vmem:[%s701] sm:$0xff]
        %v703 = vld [vmem:[%s701 + $0x8] sm:$0xff]
        %v704 = vld [vmem:[%s701 + $0x10] sm:$0xff]
        %v705 = vld [vmem:[%s701 + $0x18] sm:$0xff]
        %v706 = vld [vmem:[%s701 + $0x20] sm:$0xff]
        %v707 = vld [vmem:[%s701 + $0x28] sm:$0xff]
        %v708 = vld [vmem:[%s701 + $0x30] sm:$0xff]
        %v709 = vld [vmem:[%s701 + $0x38] sm:$0xff]
        %710 = vset.pattern.permute.xlu0 5
        %711 = vperm.xlu0 %710, %v558
        %v712 = vpop.permute.xlu0 %711
        %v714 = vmul.f32 %v712, %v702
        %v715 = vmul.f32 %v712, %v703
        %v716 = vmul.f32 %v712, %v704
        %v717 = vmul.f32 %v712, %v705
        %v718 = vmul.f32 %v712, %v706
        %v719 = vmul.f32 %v712, %v707
        %v720 = vmul.f32 %v712, %v708
        %v721 = vmul.f32 %v712, %v709
        %v722 = vadd.f32 %v693, %v714
        %v723 = vadd.f32 %v694, %v715
        %v724 = vadd.f32 %v695, %v716
        %v725 = vadd.f32 %v696, %v717
        %v726 = vadd.f32 %v697, %v718
        %v727 = vadd.f32 %v698, %v719
        %v728 = vadd.f32 %v699, %v720
        %v729 = vadd.f32 %v700, %v721
        %s730 = scalar_lea.vmem %s338, 384 [#allocation8]
        %v731 = vld [vmem:[%s730] sm:$0xff]
        %v732 = vld [vmem:[%s730 + $0x8] sm:$0xff]
        %v733 = vld [vmem:[%s730 + $0x10] sm:$0xff]
        %v734 = vld [vmem:[%s730 + $0x18] sm:$0xff]
        %v735 = vld [vmem:[%s730 + $0x20] sm:$0xff]
        %v736 = vld [vmem:[%s730 + $0x28] sm:$0xff]
        %v737 = vld [vmem:[%s730 + $0x30] sm:$0xff]
        %v738 = vld [vmem:[%s730 + $0x38] sm:$0xff]
        %739 = vset.pattern.permute.xlu0 6
        %740 = vperm.xlu0 %739, %v558
        %v741 = vpop.permute.xlu0 %740
        %v743 = vmul.f32 %v741, %v731
        %v744 = vmul.f32 %v741, %v732
        %v745 = vmul.f32 %v741, %v733
        %v746 = vmul.f32 %v741, %v734
        %v747 = vmul.f32 %v741, %v735
        %v748 = vmul.f32 %v741, %v736
        %v749 = vmul.f32 %v741, %v737
        %v750 = vmul.f32 %v741, %v738
        %v751 = vadd.f32 %v722, %v743
        %v752 = vadd.f32 %v723, %v744
        %v753 = vadd.f32 %v724, %v745
        %v754 = vadd.f32 %v725, %v746
        %v755 = vadd.f32 %v726, %v747
        %v756 = vadd.f32 %v727, %v748
        %v757 = vadd.f32 %v728, %v749
        %v758 = vadd.f32 %v729, %v750
        %s759 = scalar_lea.vmem %s338, 448 [#allocation8]
        %v760 = vld [vmem:[%s759] sm:$0xff]
        %v761 = vld [vmem:[%s759 + $0x8] sm:$0xff]
        %v762 = vld [vmem:[%s759 + $0x10] sm:$0xff]
        %v763 = vld [vmem:[%s759 + $0x18] sm:$0xff]
        %v764 = vld [vmem:[%s759 + $0x20] sm:$0xff]
        %v765 = vld [vmem:[%s759 + $0x28] sm:$0xff]
        %v766 = vld [vmem:[%s759 + $0x30] sm:$0xff]
        %v767 = vld [vmem:[%s759 + $0x38] sm:$0xff]
        %768 = vset.pattern.permute.xlu0 7
        %769 = vperm.xlu0 %768, %v558
        %v770 = vpop.permute.xlu0 %769
        %v772 = vmul.f32 %v770, %v760
        %v773 = vmul.f32 %v770, %v761
        %v774 = vmul.f32 %v770, %v762
        %v775 = vmul.f32 %v770, %v763
        %v776 = vmul.f32 %v770, %v764
        %v777 = vmul.f32 %v770, %v765
        %v778 = vmul.f32 %v770, %v766
        %v779 = vmul.f32 %v770, %v767
        %v780 = vadd.f32 %v751, %v772
        %v781 = vadd.f32 %v752, %v773
        %v782 = vadd.f32 %v753, %v774
        %v783 = vadd.f32 %v754, %v775
        %v784 = vadd.f32 %v755, %v776
        %v785 = vadd.f32 %v756, %v777
        %v786 = vadd.f32 %v757, %v778
        %v787 = vadd.f32 %v758, %v779
        %788 = vst [vmem:[%s374] sm:$0xff] %v780
        %789 = vst [vmem:[%s374 + $0x8] sm:$0xff] %v781
        %790 = vst [vmem:[%s374 + $0x10] sm:$0xff] %v782
        %791 = vst [vmem:[%s374 + $0x18] sm:$0xff] %v783
        %792 = vst [vmem:[%s374 + $0x20] sm:$0xff] %v784
        %793 = vst [vmem:[%s374 + $0x28] sm:$0xff] %v785
        %794 = vst [vmem:[%s374 + $0x30] sm:$0xff] %v786
        %795 = vst [vmem:[%s374 + $0x38] sm:$0xff] %v787
        %s796 = sand.u32 %s172, 1
        %s797 = scalar_lea.sflag [#allocation4], %s796
        %s798 = sand.u32 %s172, 1
        %s799 = smul.addr %s798, 64
        %s800 = scalar_lea.vmem [#allocation9], %s799
        %s801 = sand.u32 %s198, 1
        %s802 = scalar_lea.sflag [#allocation11], %s801
        %s803 = sand.u32 %s198, 1
        %s804 = smul.addr %s803, 8
        %s805 = scalar_lea.vmem [#allocation10], %s804
        // Predicated region
        $region61: #{tpu_custom_call.1} parent=39 // pred_check
          %p806 = pneg %p182
        $region62: #{tpu_custom_call.1} parent=39 // pred_check_branch
          %808 = sbr.rel (%p806) target = $region64
        $region63: #{tpu_custom_call.1} parent=39 // pred_region
          %s809 = smul.u32 8, %s33
          %s811 = ssub.s32 1024, 1024
          %812 = vsyncadd %s797, %s811
          %s813 = smul.addr %s32, 8
          %s814 = sadd.s32 %s809, %s813
          %s815 = smul.addr %s814, 128
          %s816 = scalar_lea.hbm %s5, %s815
          %s818 = sshll.u32 %s800, 4
          %s819 = int_to_ptr.vmem [resolvable:$true] %s818
          %821 = dma.vmem_to_hbm [thread:$0]  %s819, 1024, %s816, %s797
        $region64: #{tpu_custom_call.1} parent=39 // pred_fallthru
          _
        // Predicated region
        $region65: #{tpu_custom_call.1} parent=39 // pred_check
          %p822 = pneg %p208
        $region66: #{tpu_custom_call.1} parent=39 // pred_check_branch
          %824 = sbr.rel (%p822) target = $region68
        $region67: #{tpu_custom_call.1} parent=39 // pred_region
          %s826 = ssub.s32 128, 128
          %827 = vsyncadd %s802, %s826
          %s828 = smul.addr %s32, 128
          %s829 = scalar_lea.hbm %s6, %s828
          %s831 = sshll.u32 %s805, 4
          %s832 = int_to_ptr.vmem [resolvable:$true] %s831
          %834 = dma.vmem_to_hbm [thread:$0]  %s832, 128, %s829, %s802
        $region68: #{tpu_custom_call.1} parent=39 // pred_fallthru
          _
      $region40: #{tpu_custom_call.1} parent=5 // pred_fallthru
        _
      %p835 = scmp.le.s32.totalorder 2, %s23
      // Predicated region
      $region69: #{tpu_custom_call.1} parent=5 // pred_check
        %p836 = pneg %p835
      $region70: #{tpu_custom_call.1} parent=5 // pred_check_branch
        %838 = sbr.rel (%p836) target = $region72
      $region71: #{tpu_custom_call.1} parent=5 // pred_region
        %s839 = ssub.s32 %s23, 2
        // Predicated region
        $region73: #{tpu_custom_call.1} parent=71 // pred_check
          %p840 = pneg %p188
        $region74: #{tpu_custom_call.1} parent=71 // pred_check_branch
          %842 = sbr.rel (%p840) target = $region76
        $region75: #{tpu_custom_call.1} parent=71 // pred_region
          %s843 = sand.u32 %s173, 1
          %s844 = scalar_lea.sflag [#allocation4], %s843
          %s845 = sand.u32 %s173, 1
          %s846 = smul.addr %s845, 64
          %s847 = scalar_lea.vmem [#allocation9], %s846
          %848 = dma.done %s844, 1024
        $region76: #{tpu_custom_call.1} parent=71 // pred_fallthru
          _
        // Predicated region
        $region77: #{tpu_custom_call.1} parent=71 // pred_check
          %p849 = pneg %p214
        $region78: #{tpu_custom_call.1} parent=71 // pred_check_branch
          %851 = sbr.rel (%p849) target = $region80
        $region79: #{tpu_custom_call.1} parent=71 // pred_region
          %s852 = sand.u32 %s199, 1
          %s853 = scalar_lea.sflag [#allocation11], %s852
          %s854 = sand.u32 %s199, 1
          %s855 = smul.addr %s854, 8
          %s856 = scalar_lea.vmem [#allocation10], %s855
          %857 = dma.done %s853, 128
        $region80: #{tpu_custom_call.1} parent=71 // pred_fallthru
          _
      $region72: #{tpu_custom_call.1} parent=5 // pred_fallthru
        _
    $region6: #{tpu_custom_call.1} parent=1 // loop_footer
      %s27 = sadd.s32 1, %s23
    $region7: #{tpu_custom_call.1} parent=1 // loop_footer_branch
      %22 = sbr.rel target = $region3
    $region8: #{tpu_custom_call.1} parent=1 // loop_exit
      _
    %858 = vsyncpa [#allocation3], 1
    %s859 = scalar_lea.sflag [#allocation3], 1
    %860 = vsyncpa %s859, 1
    %861 = vsyncpa [#allocation6], 1
    %862 = vsyncpa [#allocation4], 1
    %s863 = scalar_lea.sflag [#allocation4], 1
    %864 = vsyncpa %s863, 1
    %865 = vsyncpa [#allocation11], 1
    %s866 = scalar_lea.sflag [#allocation11], 1
    %867 = vsyncpa %s866, 1

</llo_original>
